<compile_context>
chip_gen: v5e
topology: v5e:2x2
jax: 0.10.0
libtpu: 0.0.40
codegen_flags: <defaults>
</compile_context>

<pallas_src>
import functools

import numpy as np
import jax
import jax.numpy as jnp
from jax.experimental import pallas as pl
from jax.experimental.pallas import tpu as pltpu


def esn_sequence_kernel(x_ref, r0_ref, wi_t_ref, wr_t_ref, wo_t_ref,
                        out_ref, r_final_ref, u_scratch, rs_scratch,
                        *, leaking_rate, unroll):
    """Run T ESN steps fully in VMEM.

    x_ref:       (T, D)  input rows (one timestep per row)
    r0_ref:      (1, N)  initial reservoir state (row vector)
    wi_t_ref:    (D, N)  W_i^T
    wr_t_ref:    (N, N)  W_r^T (already spectral-radius scaled)
    wo_t_ref:    (N, O)  W_o^T
    out_ref:     (T, O)  linear readout, one row per timestep
    r_final_ref: (1, N)  final reservoir state
    u_scratch:   (T, N)  batched input projection X @ W_i^T
    rs_scratch:  (T, N)  per-step reservoir states (for the batched readout)
    """
    a = leaking_rate
    T = x_ref.shape[0]

    # Non-recurrent input projection for ALL timesteps: one MXU matmul.
    u_scratch[...] = jnp.dot(x_ref[...], wi_t_ref[...],
                             preferred_element_type=jnp.float32)

    def step(t, r):
        # r: (1, N) row-vector state carried across timesteps.
        pre = u_scratch[pl.ds(t, 1), :] + jnp.dot(
            r, wr_t_ref[...], preferred_element_type=jnp.float32)
        r_new = (1.0 - a) * r + a * jnp.tanh(pre)
        rs_scratch[pl.ds(t, 1), :] = r_new
        return r_new

    r_final = jax.lax.fori_loop(0, T, step, r0_ref[...], unroll=unroll)
    r_final_ref[...] = r_final.astype(r_final_ref.dtype)

    # Non-recurrent linear readout for ALL timesteps: one MXU matmul.
    out_ref[...] = jnp.dot(rs_scratch[...], wo_t_ref[...],
                           preferred_element_type=jnp.float32
                           ).astype(out_ref.dtype)


def esn_forward_sequence(x_seq, r0_row, wi_t, wr_t, wo_t, leaking_rate):
    """Run the ESN over a (T, D) input sequence.

    Returns (outputs (T, O), final reservoir state (1, N))."""
    x_seq = jnp.asarray(x_seq, jnp.float32)
    T, _ = x_seq.shape
    N = wr_t.shape[0]
    O = wo_t.shape[1]

    # Fully unroll short fixed trip-counts; cap unroll factor for long ones.
    unroll = True if T <= 16 else 8

    kernel = functools.partial(esn_sequence_kernel,
                               leaking_rate=float(leaking_rate),
                               unroll=unroll)
    vmem = pl.BlockSpec(memory_space=pltpu.MemorySpace.VMEM)

    out_seq, r_final = pl.pallas_call(
        kernel,
        out_shape=(jax.ShapeDtypeStruct((T, O), jnp.float32),
                   jax.ShapeDtypeStruct((1, N), jnp.float32)),
        in_specs=[vmem] * 5,
        out_specs=(vmem, vmem),
        scratch_shapes=[pltpu.VMEM((T, N), jnp.float32),   # U = X @ W_i^T
                        pltpu.VMEM((T, N), jnp.float32)],  # per-step states
        compiler_params=pltpu.CompilerParams(
            # Tiny at these shapes; headroom for larger N / longer T while
            # staying under v7x's 64 MiB physical VMEM.
            vmem_limit_bytes=48 * 1024 * 1024),
    )(x_seq, r0_row, wi_t, wr_t, wo_t)
    return out_seq, r_final


def esn_forward(x, r_t_col, wi_t, wr_t, wo_t, leaking_rate):
    """Single-step forward mirroring EsnTorch.forward (column-vector API).

    x: (D, 1) (or any shape flattening to D) input column.
    r_t_col: (N, 1) previous state.  Returns ((O, 1) output, (N, 1) new state).
    """
    x_row = jnp.reshape(jnp.asarray(x, jnp.float32), (1, -1))
    r0_row = jnp.reshape(jnp.asarray(r_t_col, jnp.float32), (1, -1))
    out_seq, r_final = esn_forward_sequence(
        x_row, r0_row, wi_t, wr_t, wo_t, leaking_rate)
    return out_seq.reshape(-1, 1), r_final.reshape(-1, 1)


def prepare_weights(W_i, W_r, W_o):
    """One-time host-side transpose so the kernel computes lane-dense row @ W^T."""
    return (jnp.asarray(W_i, jnp.float32).T,   # (D, N)
            jnp.asarray(W_r, jnp.float32).T,   # (N, N)
            jnp.asarray(W_o, jnp.float32).T)   # (N, O)


if __name__ == "__main__":
    # Hyperparameters (the `parameters` dict of the torch module).
    size = 128            # reservoir size N
    input_dim = 64        # D
    output_dim = 16       # O
    seq_len = 8           # number of forward() calls folded into one kernel
    spectral_radius = 0.9
    leaking_rate = 0.3

    key = jax.random.PRNGKey(0)
    k_i, k_r, k_o, k_x = jax.random.split(key, 4)
    W_i = jax.random.uniform(k_i, (size, input_dim), jnp.float32, -1.0, 1.0)
    W_r = jax.random.uniform(k_r, (size, size), jnp.float32, -1.0, 1.0)
    W_o = jax.random.normal(k_o, (output_dim, size), jnp.float32) * 0.1

    # Spectral-radius rescaling (torch.eig equivalent) — host-side setup glue.
    rad = float(np.max(np.abs(np.linalg.eigvals(np.asarray(W_r)))))
    W_r = W_r / rad * spectral_radius

    wi_t, wr_t, wo_t = prepare_weights(W_i, W_r, W_o)

    # Input sequence: T timesteps, each the flattened (D,) column of the
    # original per-call input.
    x_seq = jax.random.normal(k_x, (seq_len, input_dim), jnp.float32)
    r0_row = jnp.zeros((1, size), jnp.float32)

    out_seq, r_final = esn_forward_sequence(
        x_seq, r0_row, wi_t, wr_t, wo_t, leaking_rate)
    out_seq = jax.block_until_ready(out_seq)
    r_final = jax.block_until_ready(r_final)

    # Also exercise the single-step, column-vector API (exact torch signature).
    out1, r1 = esn_forward(x_seq[0].reshape(-1, 1),
                           jnp.zeros((size, 1), jnp.float32),
                           wi_t, wr_t, wo_t, leaking_rate)
    out1 = jax.block_until_ready(out1)

    # Step-by-step float64 reference mirroring EsnTorch.forward.
    W_i64 = np.asarray(W_i, np.float64)
    W_r64 = np.asarray(W_r, np.float64)
    W_o64 = np.asarray(W_o, np.float64)
    r = np.zeros((size, 1), np.float64)
    outs_ref = []
    for t in range(seq_len):
        x_col = np.asarray(x_seq[t], np.float64).reshape(-1, 1)
        term1 = W_i64 @ x_col
        term2 = W_r64 @ r
        r = (1.0 - leaking_rate) * r + leaking_rate * np.tanh(term1 + term2)
        outs_ref.append((W_o64 @ r).reshape(-1))
    outs_ref = np.stack(outs_ref)          # (T, O)
    r_ref = r.reshape(1, -1)               # (1, N)

    assert out_seq.shape == (seq_len, output_dim)
    assert r_final.shape == (1, size)
    np.testing.assert_allclose(np.asarray(out_seq), outs_ref,
                               rtol=1e-4, atol=1e-4)
    np.testing.assert_allclose(np.asarray(r_final), r_ref,
                               rtol=1e-4, atol=1e-4)
    np.testing.assert_allclose(np.asarray(out1).reshape(-1), outs_ref[0],
                               rtol=1e-4, atol=1e-4)

    print("KERNEL_OK")
</pallas_src>

<mosaic_0001>
module attributes {stable_mosaic.version = 11 : i64} {
  func.func @esn_sequence_kernel(%arg0: memref<8x64xf32, #tpu.memory_space<vmem>>, %arg1: memref<1x128xf32, #tpu.memory_space<vmem>>, %arg2: memref<64x128xf32, #tpu.memory_space<vmem>>, %arg3: memref<128x128xf32, #tpu.memory_space<vmem>>, %arg4: memref<128x16xf32, #tpu.memory_space<vmem>>, %arg5: memref<8x16xf32, #tpu.memory_space<vmem>>, %arg6: memref<1x128xf32, #tpu.memory_space<vmem>>, %arg7: memref<8x128xf32, #tpu.memory_space<vmem>>, %arg8: memref<8x128xf32, #tpu.memory_space<vmem>>) attributes {dimension_semantics = [], scalar_prefetch = 0 : i64, scratch_operands = 2 : i64, tpu.core_type = #tpu.core_type<tc>} {
    %c0 = arith.constant 0 : index
    %c0_0 = arith.constant 0 : index
    %0 = vector.load %arg0[%c0, %c0_0] : memref<8x64xf32, #tpu.memory_space<vmem>>, vector<8x64xf32>
    %c0_1 = arith.constant 0 : index
    %c0_2 = arith.constant 0 : index
    %1 = vector.load %arg2[%c0_1, %c0_2] : memref<64x128xf32, #tpu.memory_space<vmem>>, vector<64x128xf32>
    %cst = arith.constant dense<0.000000e+00> : vector<8x128xf32>
    %2 = tpu.matmul %0, %1, %cst {dimension_numbers = #tpu.dot_dimension_numbers<[1], [0], [0], [1], [0, 0, 1, 1], [], []>} : vector<8x64xf32>, vector<64x128xf32>, vector<8x128xf32> -> vector<8x128xf32>
    %c0_3 = arith.constant 0 : index
    %c0_4 = arith.constant 0 : index
    %3 = vector.load %arg7[%c0_3, %c0_4] : memref<8x128xf32, #tpu.memory_space<vmem>>, vector<8x128xf32>
    tpu.vector_store %arg7[%c0_3, %c0_4], %2 {strides = array<i32>} : memref<8x128xf32, #tpu.memory_space<vmem>>, vector<8x128xf32>,
    %c0_5 = arith.constant 0 : index
    %c0_6 = arith.constant 0 : index
    %4 = vector.load %arg1[%c0_5, %c0_6] : memref<1x128xf32, #tpu.memory_space<vmem>>, vector<1x128xf32>
    %c0_i32 = arith.constant 0 : i32
    %5 = arith.index_cast %c0_i32 : i32 to index
    %c0_7 = arith.constant 0 : index
    %6 = vector.load %arg7[%5, %c0_7] : memref<8x128xf32, #tpu.memory_space<vmem>>, vector<1x128xf32>
    %c0_8 = arith.constant 0 : index
    %c0_9 = arith.constant 0 : index
    %7 = vector.load %arg3[%c0_8, %c0_9] : memref<128x128xf32, #tpu.memory_space<vmem>>, vector<128x128xf32>
    %cst_10 = arith.constant dense<0.000000e+00> : vector<1x128xf32>
    %8 = tpu.matmul %4, %7, %cst_10 {dimension_numbers = #tpu.dot_dimension_numbers<[1], [0], [0], [1], [0, 0, 1, 1], [], []>} : vector<1x128xf32>, vector<128x128xf32>, vector<1x128xf32> -> vector<1x128xf32>
    %9 = arith.addf %6, %8 : vector<1x128xf32>
    %cst_11 = arith.constant 0.699999988 : f32
    %10 = vector.broadcast %cst_11 : f32 to vector<1x128xf32>
    %11 = arith.mulf %10, %4 : vector<1x128xf32>
    %12 = math.tanh %9 : vector<1x128xf32>
    %cst_12 = arith.constant 3.000000e-01 : f32
    %13 = vector.broadcast %cst_12 : f32 to vector<1x128xf32>
    %14 = arith.mulf %13, %12 : vector<1x128xf32>
    %15 = arith.addf %11, %14 : vector<1x128xf32>
    %16 = arith.index_cast %c0_i32 : i32 to index
    %c0_13 = arith.constant 0 : index
    %17 = vector.load %arg8[%16, %c0_13] : memref<8x128xf32, #tpu.memory_space<vmem>>, vector<1x128xf32>
    tpu.vector_store %arg8[%16, %c0_13], %15 {strides = array<i32>} : memref<8x128xf32, #tpu.memory_space<vmem>>, vector<1x128xf32>,
    %c1_i32 = arith.constant 1 : i32
    %18 = arith.index_cast %c1_i32 : i32 to index
    %c0_14 = arith.constant 0 : index
    %19 = vector.load %arg7[%18, %c0_14] : memref<8x128xf32, #tpu.memory_space<vmem>>, vector<1x128xf32>
    %c0_15 = arith.constant 0 : index
    %c0_16 = arith.constant 0 : index
    %20 = vector.load %arg3[%c0_15, %c0_16] : memref<128x128xf32, #tpu.memory_space<vmem>>, vector<128x128xf32>
    %cst_17 = arith.constant dense<0.000000e+00> : vector<1x128xf32>
    %21 = tpu.matmul %15, %20, %cst_17 {dimension_numbers = #tpu.dot_dimension_numbers<[1], [0], [0], [1], [0, 0, 1, 1], [], []>} : vector<1x128xf32>, vector<128x128xf32>, vector<1x128xf32> -> vector<1x128xf32>
    %22 = arith.addf %19, %21 : vector<1x128xf32>
    %cst_18 = arith.constant 0.699999988 : f32
    %23 = vector.broadcast %cst_18 : f32 to vector<1x128xf32>
    %24 = arith.mulf %23, %15 : vector<1x128xf32>
    %25 = math.tanh %22 : vector<1x128xf32>
    %cst_19 = arith.constant 3.000000e-01 : f32
    %26 = vector.broadcast %cst_19 : f32 to vector<1x128xf32>
    %27 = arith.mulf %26, %25 : vector<1x128xf32>
    %28 = arith.addf %24, %27 : vector<1x128xf32>
    %29 = arith.index_cast %c1_i32 : i32 to index
    %c0_20 = arith.constant 0 : index
    %30 = vector.load %arg8[%29, %c0_20] : memref<8x128xf32, #tpu.memory_space<vmem>>, vector<1x128xf32>
    tpu.vector_store %arg8[%29, %c0_20], %28 {strides = array<i32>} : memref<8x128xf32, #tpu.memory_space<vmem>>, vector<1x128xf32>,
    %c2_i32 = arith.constant 2 : i32
    %31 = arith.index_cast %c2_i32 : i32 to index
    %c0_21 = arith.constant 0 : index
    %32 = vector.load %arg7[%31, %c0_21] : memref<8x128xf32, #tpu.memory_space<vmem>>, vector<1x128xf32>
    %c0_22 = arith.constant 0 : index
    %c0_23 = arith.constant 0 : index
    %33 = vector.load %arg3[%c0_22, %c0_23] : memref<128x128xf32, #tpu.memory_space<vmem>>, vector<128x128xf32>
    %cst_24 = arith.constant dense<0.000000e+00> : vector<1x128xf32>
    %34 = tpu.matmul %28, %33, %cst_24 {dimension_numbers = #tpu.dot_dimension_numbers<[1], [0], [0], [1], [0, 0, 1, 1], [], []>} : vector<1x128xf32>, vector<128x128xf32>, vector<1x128xf32> -> vector<1x128xf32>
    %35 = arith.addf %32, %34 : vector<1x128xf32>
    %cst_25 = arith.constant 0.699999988 : f32
    %36 = vector.broadcast %cst_25 : f32 to vector<1x128xf32>
    %37 = arith.mulf %36, %28 : vector<1x128xf32>
    %38 = math.tanh %35 : vector<1x128xf32>
    %cst_26 = arith.constant 3.000000e-01 : f32
    %39 = vector.broadcast %cst_26 : f32 to vector<1x128xf32>
    %40 = arith.mulf %39, %38 : vector<1x128xf32>
    %41 = arith.addf %37, %40 : vector<1x128xf32>
    %42 = arith.index_cast %c2_i32 : i32 to index
    %c0_27 = arith.constant 0 : index
    %43 = vector.load %arg8[%42, %c0_27] : memref<8x128xf32, #tpu.memory_space<vmem>>, vector<1x128xf32>
    tpu.vector_store %arg8[%42, %c0_27], %41 {strides = array<i32>} : memref<8x128xf32, #tpu.memory_space<vmem>>, vector<1x128xf32>,
    %c3_i32 = arith.constant 3 : i32
    %44 = arith.index_cast %c3_i32 : i32 to index
    %c0_28 = arith.constant 0 : index
    %45 = vector.load %arg7[%44, %c0_28] : memref<8x128xf32, #tpu.memory_space<vmem>>, vector<1x128xf32>
    %c0_29 = arith.constant 0 : index
    %c0_30 = arith.constant 0 : index
    %46 = vector.load %arg3[%c0_29, %c0_30] : memref<128x128xf32, #tpu.memory_space<vmem>>, vector<128x128xf32>
    %cst_31 = arith.constant dense<0.000000e+00> : vector<1x128xf32>
    %47 = tpu.matmul %41, %46, %cst_31 {dimension_numbers = #tpu.dot_dimension_numbers<[1], [0], [0], [1], [0, 0, 1, 1], [], []>} : vector<1x128xf32>, vector<128x128xf32>, vector<1x128xf32> -> vector<1x128xf32>
    %48 = arith.addf %45, %47 : vector<1x128xf32>
    %cst_32 = arith.constant 0.699999988 : f32
    %49 = vector.broadcast %cst_32 : f32 to vector<1x128xf32>
    %50 = arith.mulf %49, %41 : vector<1x128xf32>
    %51 = math.tanh %48 : vector<1x128xf32>
    %cst_33 = arith.constant 3.000000e-01 : f32
    %52 = vector.broadcast %cst_33 : f32 to vector<1x128xf32>
    %53 = arith.mulf %52, %51 : vector<1x128xf32>
    %54 = arith.addf %50, %53 : vector<1x128xf32>
    %55 = arith.index_cast %c3_i32 : i32 to index
    %c0_34 = arith.constant 0 : index
    %56 = vector.load %arg8[%55, %c0_34] : memref<8x128xf32, #tpu.memory_space<vmem>>, vector<1x128xf32>
    tpu.vector_store %arg8[%55, %c0_34], %54 {strides = array<i32>} : memref<8x128xf32, #tpu.memory_space<vmem>>, vector<1x128xf32>,
    %c4_i32 = arith.constant 4 : i32
    %57 = arith.index_cast %c4_i32 : i32 to index
    %c0_35 = arith.constant 0 : index
    %58 = vector.load %arg7[%57, %c0_35] : memref<8x128xf32, #tpu.memory_space<vmem>>, vector<1x128xf32>
    %c0_36 = arith.constant 0 : index
    %c0_37 = arith.constant 0 : index
    %59 = vector.load %arg3[%c0_36, %c0_37] : memref<128x128xf32, #tpu.memory_space<vmem>>, vector<128x128xf32>
    %cst_38 = arith.constant dense<0.000000e+00> : vector<1x128xf32>
    %60 = tpu.matmul %54, %59, %cst_38 {dimension_numbers = #tpu.dot_dimension_numbers<[1], [0], [0], [1], [0, 0, 1, 1], [], []>} : vector<1x128xf32>, vector<128x128xf32>, vector<1x128xf32> -> vector<1x128xf32>
    %61 = arith.addf %58, %60 : vector<1x128xf32>
    %cst_39 = arith.constant 0.699999988 : f32
    %62 = vector.broadcast %cst_39 : f32 to vector<1x128xf32>
    %63 = arith.mulf %62, %54 : vector<1x128xf32>
    %64 = math.tanh %61 : vector<1x128xf32>
    %cst_40 = arith.constant 3.000000e-01 : f32
    %65 = vector.broadcast %cst_40 : f32 to vector<1x128xf32>
    %66 = arith.mulf %65, %64 : vector<1x128xf32>
    %67 = arith.addf %63, %66 : vector<1x128xf32>
    %68 = arith.index_cast %c4_i32 : i32 to index
    %c0_41 = arith.constant 0 : index
    %69 = vector.load %arg8[%68, %c0_41] : memref<8x128xf32, #tpu.memory_space<vmem>>, vector<1x128xf32>
    tpu.vector_store %arg8[%68, %c0_41], %67 {strides = array<i32>} : memref<8x128xf32, #tpu.memory_space<vmem>>, vector<1x128xf32>,
    %c5_i32 = arith.constant 5 : i32
    %70 = arith.index_cast %c5_i32 : i32 to index
    %c0_42 = arith.constant 0 : index
    %71 = vector.load %arg7[%70, %c0_42] : memref<8x128xf32, #tpu.memory_space<vmem>>, vector<1x128xf32>
    %c0_43 = arith.constant 0 : index
    %c0_44 = arith.constant 0 : index
    %72 = vector.load %arg3[%c0_43, %c0_44] : memref<128x128xf32, #tpu.memory_space<vmem>>, vector<128x128xf32>
    %cst_45 = arith.constant dense<0.000000e+00> : vector<1x128xf32>
    %73 = tpu.matmul %67, %72, %cst_45 {dimension_numbers = #tpu.dot_dimension_numbers<[1], [0], [0], [1], [0, 0, 1, 1], [], []>} : vector<1x128xf32>, vector<128x128xf32>, vector<1x128xf32> -> vector<1x128xf32>
    %74 = arith.addf %71, %73 : vector<1x128xf32>
    %cst_46 = arith.constant 0.699999988 : f32
    %75 = vector.broadcast %cst_46 : f32 to vector<1x128xf32>
    %76 = arith.mulf %75, %67 : vector<1x128xf32>
    %77 = math.tanh %74 : vector<1x128xf32>
    %cst_47 = arith.constant 3.000000e-01 : f32
    %78 = vector.broadcast %cst_47 : f32 to vector<1x128xf32>
    %79 = arith.mulf %78, %77 : vector<1x128xf32>
    %80 = arith.addf %76, %79 : vector<1x128xf32>
    %81 = arith.index_cast %c5_i32 : i32 to index
    %c0_48 = arith.constant 0 : index
    %82 = vector.load %arg8[%81, %c0_48] : memref<8x128xf32, #tpu.memory_space<vmem>>, vector<1x128xf32>
    tpu.vector_store %arg8[%81, %c0_48], %80 {strides = array<i32>} : memref<8x128xf32, #tpu.memory_space<vmem>>, vector<1x128xf32>,
    %c6_i32 = arith.constant 6 : i32
    %83 = arith.index_cast %c6_i32 : i32 to index
    %c0_49 = arith.constant 0 : index
    %84 = vector.load %arg7[%83, %c0_49] : memref<8x128xf32, #tpu.memory_space<vmem>>, vector<1x128xf32>
    %c0_50 = arith.constant 0 : index
    %c0_51 = arith.constant 0 : index
    %85 = vector.load %arg3[%c0_50, %c0_51] : memref<128x128xf32, #tpu.memory_space<vmem>>, vector<128x128xf32>
    %cst_52 = arith.constant dense<0.000000e+00> : vector<1x128xf32>
    %86 = tpu.matmul %80, %85, %cst_52 {dimension_numbers = #tpu.dot_dimension_numbers<[1], [0], [0], [1], [0, 0, 1, 1], [], []>} : vector<1x128xf32>, vector<128x128xf32>, vector<1x128xf32> -> vector<1x128xf32>
    %87 = arith.addf %84, %86 : vector<1x128xf32>
    %cst_53 = arith.constant 0.699999988 : f32
    %88 = vector.broadcast %cst_53 : f32 to vector<1x128xf32>
    %89 = arith.mulf %88, %80 : vector<1x128xf32>
    %90 = math.tanh %87 : vector<1x128xf32>
    %cst_54 = arith.constant 3.000000e-01 : f32
    %91 = vector.broadcast %cst_54 : f32 to vector<1x128xf32>
    %92 = arith.mulf %91, %90 : vector<1x128xf32>
    %93 = arith.addf %89, %92 : vector<1x128xf32>
    %94 = arith.index_cast %c6_i32 : i32 to index
    %c0_55 = arith.constant 0 : index
    %95 = vector.load %arg8[%94, %c0_55] : memref<8x128xf32, #tpu.memory_space<vmem>>, vector<1x128xf32>
    tpu.vector_store %arg8[%94, %c0_55], %93 {strides = array<i32>} : memref<8x128xf32, #tpu.memory_space<vmem>>, vector<1x128xf32>,
    %c7_i32 = arith.constant 7 : i32
    %96 = arith.index_cast %c7_i32 : i32 to index
    %c0_56 = arith.constant 0 : index
    %97 = vector.load %arg7[%96, %c0_56] : memref<8x128xf32, #tpu.memory_space<vmem>>, vector<1x128xf32>
    %c0_57 = arith.constant 0 : index
    %c0_58 = arith.constant 0 : index
    %98 = vector.load %arg3[%c0_57, %c0_58] : memref<128x128xf32, #tpu.memory_space<vmem>>, vector<128x128xf32>
    %cst_59 = arith.constant dense<0.000000e+00> : vector<1x128xf32>
    %99 = tpu.matmul %93, %98, %cst_59 {dimension_numbers = #tpu.dot_dimension_numbers<[1], [0], [0], [1], [0, 0, 1, 1], [], []>} : vector<1x128xf32>, vector<128x128xf32>, vector<1x128xf32> -> vector<1x128xf32>
    %100 = arith.addf %97, %99 : vector<1x128xf32>
    %cst_60 = arith.constant 0.699999988 : f32
    %101 = vector.broadcast %cst_60 : f32 to vector<1x128xf32>
    %102 = arith.mulf %101, %93 : vector<1x128xf32>
    %103 = math.tanh %100 : vector<1x128xf32>
    %cst_61 = arith.constant 3.000000e-01 : f32
    %104 = vector.broadcast %cst_61 : f32 to vector<1x128xf32>
    %105 = arith.mulf %104, %103 : vector<1x128xf32>
    %106 = arith.addf %102, %105 : vector<1x128xf32>
    %107 = arith.index_cast %c7_i32 : i32 to index
    %c0_62 = arith.constant 0 : index
    %108 = vector.load %arg8[%107, %c0_62] : memref<8x128xf32, #tpu.memory_space<vmem>>, vector<1x128xf32>
    tpu.vector_store %arg8[%107, %c0_62], %106 {strides = array<i32>} : memref<8x128xf32, #tpu.memory_space<vmem>>, vector<1x128xf32>,
    %c8_i32 = arith.constant 8 : i32
    %c0_63 = arith.constant 0 : index
    %c0_64 = arith.constant 0 : index
    %109 = vector.load %arg6[%c0_63, %c0_64] : memref<1x128xf32, #tpu.memory_space<vmem>>, vector<1x128xf32>
    tpu.vector_store %arg6[%c0_63, %c0_64], %106 {strides = array<i32>} : memref<1x128xf32, #tpu.memory_space<vmem>>, vector<1x128xf32>,
    %c0_65 = arith.constant 0 : index
    %c0_66 = arith.constant 0 : index
    %110 = vector.load %arg8[%c0_65, %c0_66] : memref<8x128xf32, #tpu.memory_space<vmem>>, vector<8x128xf32>
    %c0_67 = arith.constant 0 : index
    %c0_68 = arith.constant 0 : index
    %111 = vector.load %arg4[%c0_67, %c0_68] : memref<128x16xf32, #tpu.memory_space<vmem>>, vector<128x16xf32>
    %cst_69 = arith.constant dense<0.000000e+00> : vector<8x16xf32>
    %112 = tpu.matmul %110, %111, %cst_69 {dimension_numbers = #tpu.dot_dimension_numbers<[1], [0], [0], [1], [0, 0, 1, 1], [], []>} : vector<8x128xf32>, vector<128x16xf32>, vector<8x16xf32> -> vector<8x16xf32>
    %c0_70 = arith.constant 0 : index
    %c0_71 = arith.constant 0 : index
    %113 = vector.load %arg5[%c0_70, %c0_71] : memref<8x16xf32, #tpu.memory_space<vmem>>, vector<8x16xf32>
    tpu.vector_store %arg5[%c0_70, %c0_71], %112 {strides = array<i32>} : memref<8x16xf32, #tpu.memory_space<vmem>>, vector<8x16xf32>,
    return
  }
}

</mosaic_0001>

<llo_original>
// kernel: tpu_custom_call.1
$region0: #{tpu_custom_call.1}
  #allocation0 [shape = 'u32[]', space=smem, size = 0x4, offset = 0x4, fixed_abs, tag = 'smem constant byte address 0x4 - core index']
  #allocation1 [shape = 'u32[72,128]{1,0:T(1,128)}', space=vmem, size = 0x9000, scoped, tag = 'internal scratch']
  #allocation2 [shape = 'f32[8,128]{1,0:T(8,128)}', space=vmem, size = 0x1000, scoped, tag = 'scratch operand']
  #allocation3 [shape = 'f32[8,128]{1,0:T(8,128)}', space=vmem, size = 0x1000, scoped, tag = 'scratch operand']
  %s0 = inlined_call_operand.vmem [shape: f32[8,64], index: 0, kind: input, shape index: {}]
  %s1 = inlined_call_operand.vmem [shape: f32[1,128], index: 1, kind: input, shape index: {}]
  %s2 = inlined_call_operand.hbm [shape: f32[64,128], index: 2, kind: input, shape index: {}]
  %s3 = inlined_call_operand.vmem [shape: f32[128,128], index: 3, kind: input, shape index: {}]
  %s4 = inlined_call_operand.vmem [shape: f32[128,16], index: 4, kind: input, shape index: {}]
  %s5 = inlined_call_operand.hbm [shape: f32[8,16], index: 5, kind: output, shape index: {0}]
  %s6 = inlined_call_operand.hbm [shape: f32[1,128], index: 6, kind: output, shape index: {1}]
  %7 = xla_tuple %s5, %s6
  %s8 = sld [smem:[#allocation0]]
  $region42: #{tpu_custom_call.1} parent=0
    _
  %s10 = ssub.s32 1, %s8
  %s11 = scalar_select 0, %s10, %s8
  $region1: #{tpu_custom_call.1} parent=0
    #allocation4 [shape = 'u8[32768]{0}', space=vmem, size = 0x8000, scoped, tag = 'input window, operand 2, single buffered']
    #allocation5 [shape = 's32[1]{0}', space=sflag, size = 0x4, scoped, tag = 'scoped memory for tpu_custom_call.1']
    #allocation6 [shape = 's32[1]{0}', space=sflag, size = 0x4, scoped, tag = 'scoped memory for tpu_custom_call.1']
    #allocation7 [shape = 'u8[4096]{0}', space=vmem, size = 0x1000, scoped, tag = 'output window, operand 0, single buffered']
    #allocation8 [shape = 'u8[512]{0}', space=vmem, size = 0x400, scoped, tag = 'output window, operand 1, single buffered']
    #allocation9 [shape = 's32[1]{0}', space=sflag, size = 0x4, scoped, tag = 'scoped memory for tpu_custom_call.1']
    %12 = vsyncpa [#allocation5], 0
    %13 = vsyncpa [#allocation6], 0
    %14 = vsyncpa [#allocation9], 0
    // Predicated region
    $region2: #{tpu_custom_call.1} parent=1 // pred_check
      _
    $region3: #{tpu_custom_call.1} parent=1 // pred_check_branch
      %16 = sbr.rel (0) target = $region5
    $region4: #{tpu_custom_call.1} parent=1 // pred_region
      _
    $region5: #{tpu_custom_call.1} parent=1 // pred_fallthru
      _
    // Predicated region
    $region6: #{tpu_custom_call.1} parent=1 // pred_check
      _
    $region7: #{tpu_custom_call.1} parent=1 // pred_check_branch
      %18 = sbr.rel (0) target = $region9
    $region8: #{tpu_custom_call.1} parent=1 // pred_region
      _
    $region9: #{tpu_custom_call.1} parent=1 // pred_fallthru
      _
    // Predicated region
    $region10: #{tpu_custom_call.1} parent=1 // pred_check
      _
    $region11: #{tpu_custom_call.1} parent=1 // pred_check_branch
      %20 = sbr.rel (0) target = $region13
    $region12: #{tpu_custom_call.1} parent=1 // pred_region
      %22 = vsyncadd [#allocation5], 0
      %s23 = sshll.u32 %s2, 4
      %s24 = int_to_ptr.hbm [resolvable:$true] %s23
      %s25 = sshll.u32 [#allocation4], 4
      %s26 = int_to_ptr.vmem [resolvable:$true] %s25
      %31 = dma.hbm_to_vmem [thread:$0]  %s24, 1024, %s26, [#allocation5], 128, 128, 8
    $region13: #{tpu_custom_call.1} parent=1 // pred_fallthru
      _
    // Predicated region
    $region14: #{tpu_custom_call.1} parent=1 // pred_check
      _
    $region15: #{tpu_custom_call.1} parent=1 // pred_check_branch
      %33 = sbr.rel (0) target = $region17
    $region16: #{tpu_custom_call.1} parent=1 // pred_region
      _
    $region17: #{tpu_custom_call.1} parent=1 // pred_fallthru
      _
    // Predicated region
    $region18: #{tpu_custom_call.1} parent=1 // pred_check
      _
    $region19: #{tpu_custom_call.1} parent=1 // pred_check_branch
      %35 = sbr.rel (0) target = $region21
    $region20: #{tpu_custom_call.1} parent=1 // pred_region
      _
    $region21: #{tpu_custom_call.1} parent=1 // pred_fallthru
      _
    // Predicated region
    $region22: #{tpu_custom_call.1} parent=1 // pred_check
      _
    $region23: #{tpu_custom_call.1} parent=1 // pred_check_branch
      %37 = sbr.rel (0) target = $region25
    $region24: #{tpu_custom_call.1} parent=1 // pred_region
      %39 = dma.done [#allocation5], 1024
    $region25: #{tpu_custom_call.1} parent=1 // pred_fallthru
      _
    %v40 = vld [vmem:[%s0] sm:$0xff]
    %v41 = vld [vmem:[#allocation4] sm:$0xff]
    %v42 = vld [vmem:[#allocation4 + $0x8] sm:$0xff]
    %v43 = vld [vmem:[#allocation4 + $0x10] sm:$0xff]
    %v44 = vld [vmem:[#allocation4 + $0x18] sm:$0xff]
    %v45 = vld [vmem:[#allocation4 + $0x20] sm:$0xff]
    %v46 = vld [vmem:[#allocation4 + $0x28] sm:$0xff]
    %v47 = vld [vmem:[#allocation4 + $0x30] sm:$0xff]
    %v48 = vld [vmem:[#allocation4 + $0x38] sm:$0xff]
    %vm49 = vcmask 523264
    %v51 = vsel %vm49, %v40, 0
    %53 = vmatpush.msra.mxu0 0.0
    %54 = vmatpush.msra.mxu0 0.0
    %55 = vmatpush.msra.mxu0 0.0
    %56 = vmatpush.msra.mxu0 0.0
    %57 = vmatpush.msra.mxu0 0.0
    %58 = vmatpush.msra.mxu0 0.0
    %59 = vmatpush.msra.mxu0 0.0
    %60 = vmatpush.msra.mxu0 0.0
    %61 = vmatpush.msra.mxu0 %v48
    %62 = vmatpush.msra.mxu0 %v47
    %63 = vmatpush.msra.mxu0 %v46
    %64 = vmatpush.msra.mxu0 %v45
    %65 = vmatpush.msra.mxu0 %v44
    %66 = vmatpush.msra.mxu0 %v43
    %67 = vmatpush.msra.mxu0 %v42
    %68 = vmatpush.msra.mxu0 %v41
    %69 = vmatmul.f32.gmra.mxu0 %v51
    %v70 = vpop.f32.mrf.mxu0
    %v71 = vadd.f32 0.0, %v70
    %72 = vdwg.mxu0
    %73 = vst [vmem:[#allocation2] sm:$0xff] %v71
    %v74 = vld [vmem:[%s1] sm:$0x1]
    %v75 = vld [vmem:[#allocation2] sm:$0x1]
    %v76 = vld [vmem:[%s3] sm:$0xff]
    %v77 = vld [vmem:[%s3 + $0x8] sm:$0xff]
    %v78 = vld [vmem:[%s3 + $0x10] sm:$0xff]
    %v79 = vld [vmem:[%s3 + $0x18] sm:$0xff]
    %v80 = vld [vmem:[%s3 + $0x20] sm:$0xff]
    %v81 = vld [vmem:[%s3 + $0x28] sm:$0xff]
    %v82 = vld [vmem:[%s3 + $0x30] sm:$0xff]
    %v83 = vld [vmem:[%s3 + $0x38] sm:$0xff]
    %v84 = vld [vmem:[%s3 + $0x40] sm:$0xff]
    %v85 = vld [vmem:[%s3 + $0x48] sm:$0xff]
    %v86 = vld [vmem:[%s3 + $0x50] sm:$0xff]
    %v87 = vld [vmem:[%s3 + $0x58] sm:$0xff]
    %v88 = vld [vmem:[%s3 + $0x60] sm:$0xff]
    %v89 = vld [vmem:[%s3 + $0x68] sm:$0xff]
    %v90 = vld [vmem:[%s3 + $0x70] sm:$0xff]
    %v91 = vld [vmem:[%s3 + $0x78] sm:$0xff]
    %92 = vmatpush.msra.mxu0 %v91
    %93 = vmatpush.msra.mxu0 %v90
    %94 = vmatpush.msra.mxu0 %v89
    %95 = vmatpush.msra.mxu0 %v88
    %96 = vmatpush.msra.mxu0 %v87
    %97 = vmatpush.msra.mxu0 %v86
    %98 = vmatpush.msra.mxu0 %v85
    %99 = vmatpush.msra.mxu0 %v84
    %100 = vmatpush.msra.mxu0 %v83
    %101 = vmatpush.msra.mxu0 %v82
    %102 = vmatpush.msra.mxu0 %v81
    %103 = vmatpush.msra.mxu0 %v80
    %104 = vmatpush.msra.mxu0 %v79
    %105 = vmatpush.msra.mxu0 %v78
    %106 = vmatpush.msra.mxu0 %v77
    %107 = vmatpush.msra.mxu0 %v76
    %108 = vmatmul.f32.gmra.mxu0 %v74
    %v109 = vpop.f32.mrf.mxu0
    %v110 = vadd.f32 0.0, %v109
    %111 = vdwg.mxu0
    %v112 = vadd.f32 %v75, %v110
    %v113 = vmul.f32 %v74, 0.7
    %v114 = vtanh.pop %v112
    %v115 = vmul.f32 %v114, 0.3
    %v116 = vadd.f32 %v113, %v115
    %117 = vst [vmem:[#allocation3] sm:$0x1] %v116
    %v118 = vld [vmem:[#allocation2 + $0x1] sm:$0x1]
    %v119 = vld [vmem:[%s3] sm:$0xff]
    %v120 = vld [vmem:[%s3 + $0x8] sm:$0xff]
    %v121 = vld [vmem:[%s3 + $0x10] sm:$0xff]
    %v122 = vld [vmem:[%s3 + $0x18] sm:$0xff]
    %v123 = vld [vmem:[%s3 + $0x20] sm:$0xff]
    %v124 = vld [vmem:[%s3 + $0x28] sm:$0xff]
    %v125 = vld [vmem:[%s3 + $0x30] sm:$0xff]
    %v126 = vld [vmem:[%s3 + $0x38] sm:$0xff]
    %v127 = vld [vmem:[%s3 + $0x40] sm:$0xff]
    %v128 = vld [vmem:[%s3 + $0x48] sm:$0xff]
    %v129 = vld [vmem:[%s3 + $0x50] sm:$0xff]
    %v130 = vld [vmem:[%s3 + $0x58] sm:$0xff]
    %v131 = vld [vmem:[%s3 + $0x60] sm:$0xff]
    %v132 = vld [vmem:[%s3 + $0x68] sm:$0xff]
    %v133 = vld [vmem:[%s3 + $0x70] sm:$0xff]
    %v134 = vld [vmem:[%s3 + $0x78] sm:$0xff]
    %135 = vmatpush.msra.mxu0 %v134
    %136 = vmatpush.msra.mxu0 %v133
    %137 = vmatpush.msra.mxu0 %v132
    %138 = vmatpush.msra.mxu0 %v131
    %139 = vmatpush.msra.mxu0 %v130
    %140 = vmatpush.msra.mxu0 %v129
    %141 = vmatpush.msra.mxu0 %v128
    %142 = vmatpush.msra.mxu0 %v127
    %143 = vmatpush.msra.mxu0 %v126
    %144 = vmatpush.msra.mxu0 %v125
    %145 = vmatpush.msra.mxu0 %v124
    %146 = vmatpush.msra.mxu0 %v123
    %147 = vmatpush.msra.mxu0 %v122
    %148 = vmatpush.msra.mxu0 %v121
    %149 = vmatpush.msra.mxu0 %v120
    %150 = vmatpush.msra.mxu0 %v119
    %151 = vmatmul.f32.gmra.mxu0 %v116
    %v152 = vpop.f32.mrf.mxu0
    %v153 = vadd.f32 0.0, %v152
    %154 = vdwg.mxu0
    %v155 = vadd.f32 %v118, %v153
    %v156 = vmul.f32 %v116, 0.7
    %v157 = vtanh.pop %v155
    %v158 = vmul.f32 %v157, 0.3
    %v159 = vadd.f32 %v156, %v158
    %160 = vst [vmem:[#allocation3 + $0x1] sm:$0x1] %v159
    %v161 = vld [vmem:[#allocation2 + $0x2] sm:$0x1]
    %v162 = vld [vmem:[%s3] sm:$0xff]
    %v163 = vld [vmem:[%s3 + $0x8] sm:$0xff]
    %v164 = vld [vmem:[%s3 + $0x10] sm:$0xff]
    %v165 = vld [vmem:[%s3 + $0x18] sm:$0xff]
    %v166 = vld [vmem:[%s3 + $0x20] sm:$0xff]
    %v167 = vld [vmem:[%s3 + $0x28] sm:$0xff]
    %v168 = vld [vmem:[%s3 + $0x30] sm:$0xff]
    %v169 = vld [vmem:[%s3 + $0x38] sm:$0xff]
    %v170 = vld [vmem:[%s3 + $0x40] sm:$0xff]
    %v171 = vld [vmem:[%s3 + $0x48] sm:$0xff]
    %v172 = vld [vmem:[%s3 + $0x50] sm:$0xff]
    %v173 = vld [vmem:[%s3 + $0x58] sm:$0xff]
    %v174 = vld [vmem:[%s3 + $0x60] sm:$0xff]
    %v175 = vld [vmem:[%s3 + $0x68] sm:$0xff]
    %v176 = vld [vmem:[%s3 + $0x70] sm:$0xff]
    %v177 = vld [vmem:[%s3 + $0x78] sm:$0xff]
    %178 = vmatpush.msra.mxu0 %v177
    %179 = vmatpush.msra.mxu0 %v176
    %180 = vmatpush.msra.mxu0 %v175
    %181 = vmatpush.msra.mxu0 %v174
    %182 = vmatpush.msra.mxu0 %v173
    %183 = vmatpush.msra.mxu0 %v172
    %184 = vmatpush.msra.mxu0 %v171
    %185 = vmatpush.msra.mxu0 %v170
    %186 = vmatpush.msra.mxu0 %v169
    %187 = vmatpush.msra.mxu0 %v168
    %188 = vmatpush.msra.mxu0 %v167
    %189 = vmatpush.msra.mxu0 %v166
    %190 = vmatpush.msra.mxu0 %v165
    %191 = vmatpush.msra.mxu0 %v164
    %192 = vmatpush.msra.mxu0 %v163
    %193 = vmatpush.msra.mxu0 %v162
    %194 = vmatmul.f32.gmra.mxu0 %v159
    %v195 = vpop.f32.mrf.mxu0
    %v196 = vadd.f32 0.0, %v195
    %197 = vdwg.mxu0
    %v198 = vadd.f32 %v161, %v196
    %v199 = vmul.f32 %v159, 0.7
    %v200 = vtanh.pop %v198
    %v201 = vmul.f32 %v200, 0.3
    %v202 = vadd.f32 %v199, %v201
    %203 = vst [vmem:[#allocation3 + $0x2] sm:$0x1] %v202
    %v204 = vld [vmem:[#allocation2 + $0x3] sm:$0x1]
    %v205 = vld [vmem:[%s3] sm:$0xff]
    %v206 = vld [vmem:[%s3 + $0x8] sm:$0xff]
    %v207 = vld [vmem:[%s3 + $0x10] sm:$0xff]
    %v208 = vld [vmem:[%s3 + $0x18] sm:$0xff]
    %v209 = vld [vmem:[%s3 + $0x20] sm:$0xff]
    %v210 = vld [vmem:[%s3 + $0x28] sm:$0xff]
    %v211 = vld [vmem:[%s3 + $0x30] sm:$0xff]
    %v212 = vld [vmem:[%s3 + $0x38] sm:$0xff]
    %v213 = vld [vmem:[%s3 + $0x40] sm:$0xff]
    %v214 = vld [vmem:[%s3 + $0x48] sm:$0xff]
    %v215 = vld [vmem:[%s3 + $0x50] sm:$0xff]
    %v216 = vld [vmem:[%s3 + $0x58] sm:$0xff]
    %v217 = vld [vmem:[%s3 + $0x60] sm:$0xff]
    %v218 = vld [vmem:[%s3 + $0x68] sm:$0xff]
    %v219 = vld [vmem:[%s3 + $0x70] sm:$0xff]
    %v220 = vld [vmem:[%s3 + $0x78] sm:$0xff]
    %221 = vmatpush.msra.mxu0 %v220
    %222 = vmatpush.msra.mxu0 %v219
    %223 = vmatpush.msra.mxu0 %v218
    %224 = vmatpush.msra.mxu0 %v217
    %225 = vmatpush.msra.mxu0 %v216
    %226 = vmatpush.msra.mxu0 %v215
    %227 = vmatpush.msra.mxu0 %v214
    %228 = vmatpush.msra.mxu0 %v213
    %229 = vmatpush.msra.mxu0 %v212
    %230 = vmatpush.msra.mxu0 %v211
    %231 = vmatpush.msra.mxu0 %v210
    %232 = vmatpush.msra.mxu0 %v209
    %233 = vmatpush.msra.mxu0 %v208
    %234 = vmatpush.msra.mxu0 %v207
    %235 = vmatpush.msra.mxu0 %v206
    %236 = vmatpush.msra.mxu0 %v205
    %237 = vmatmul.f32.gmra.mxu0 %v202
    %v238 = vpop.f32.mrf.mxu0
    %v239 = vadd.f32 0.0, %v238
    %240 = vdwg.mxu0
    %v241 = vadd.f32 %v204, %v239
    %v242 = vmul.f32 %v202, 0.7
    %v243 = vtanh.pop %v241
    %v244 = vmul.f32 %v243, 0.3
    %v245 = vadd.f32 %v242, %v244
    %246 = vst [vmem:[#allocation3 + $0x3] sm:$0x1] %v245
    %v247 = vld [vmem:[#allocation2 + $0x4] sm:$0x1]
    %v248 = vld [vmem:[%s3] sm:$0xff]
    %v249 = vld [vmem:[%s3 + $0x8] sm:$0xff]
    %v250 = vld [vmem:[%s3 + $0x10] sm:$0xff]
    %v251 = vld [vmem:[%s3 + $0x18] sm:$0xff]
    %v252 = vld [vmem:[%s3 + $0x20] sm:$0xff]
    %v253 = vld [vmem:[%s3 + $0x28] sm:$0xff]
    %v254 = vld [vmem:[%s3 + $0x30] sm:$0xff]
    %v255 = vld [vmem:[%s3 + $0x38] sm:$0xff]
    %v256 = vld [vmem:[%s3 + $0x40] sm:$0xff]
    %v257 = vld [vmem:[%s3 + $0x48] sm:$0xff]
    %v258 = vld [vmem:[%s3 + $0x50] sm:$0xff]
    %v259 = vld [vmem:[%s3 + $0x58] sm:$0xff]
    %v260 = vld [vmem:[%s3 + $0x60] sm:$0xff]
    %v261 = vld [vmem:[%s3 + $0x68] sm:$0xff]
    %v262 = vld [vmem:[%s3 + $0x70] sm:$0xff]
    %v263 = vld [vmem:[%s3 + $0x78] sm:$0xff]
    %264 = vmatpush.msra.mxu0 %v263
    %265 = vmatpush.msra.mxu0 %v262
    %266 = vmatpush.msra.mxu0 %v261
    %267 = vmatpush.msra.mxu0 %v260
    %268 = vmatpush.msra.mxu0 %v259
    %269 = vmatpush.msra.mxu0 %v258
    %270 = vmatpush.msra.mxu0 %v257
    %271 = vmatpush.msra.mxu0 %v256
    %272 = vmatpush.msra.mxu0 %v255
    %273 = vmatpush.msra.mxu0 %v254
    %274 = vmatpush.msra.mxu0 %v253
    %275 = vmatpush.msra.mxu0 %v252
    %276 = vmatpush.msra.mxu0 %v251
    %277 = vmatpush.msra.mxu0 %v250
    %278 = vmatpush.msra.mxu0 %v249
    %279 = vmatpush.msra.mxu0 %v248
    %280 = vmatmul.f32.gmra.mxu0 %v245
    %v281 = vpop.f32.mrf.mxu0
    %v282 = vadd.f32 0.0, %v281
    %283 = vdwg.mxu0
    %v284 = vadd.f32 %v247, %v282
    %v285 = vmul.f32 %v245, 0.7
    %v286 = vtanh.pop %v284
    %v287 = vmul.f32 %v286, 0.3
    %v288 = vadd.f32 %v285, %v287
    %289 = vst [vmem:[#allocation3 + $0x4] sm:$0x1] %v288
    %v290 = vld [vmem:[#allocation2 + $0x5] sm:$0x1]
    %v291 = vld [vmem:[%s3] sm:$0xff]
    %v292 = vld [vmem:[%s3 + $0x8] sm:$0xff]
    %v293 = vld [vmem:[%s3 + $0x10] sm:$0xff]
    %v294 = vld [vmem:[%s3 + $0x18] sm:$0xff]
    %v295 = vld [vmem:[%s3 + $0x20] sm:$0xff]
    %v296 = vld [vmem:[%s3 + $0x28] sm:$0xff]
    %v297 = vld [vmem:[%s3 + $0x30] sm:$0xff]
    %v298 = vld [vmem:[%s3 + $0x38] sm:$0xff]
    %v299 = vld [vmem:[%s3 + $0x40] sm:$0xff]
    %v300 = vld [vmem:[%s3 + $0x48] sm:$0xff]
    %v301 = vld [vmem:[%s3 + $0x50] sm:$0xff]
    %v302 = vld [vmem:[%s3 + $0x58] sm:$0xff]
    %v303 = vld [vmem:[%s3 + $0x60] sm:$0xff]
    %v304 = vld [vmem:[%s3 + $0x68] sm:$0xff]
    %v305 = vld [vmem:[%s3 + $0x70] sm:$0xff]
    %v306 = vld [vmem:[%s3 + $0x78] sm:$0xff]
    %307 = vmatpush.msra.mxu0 %v306
    %308 = vmatpush.msra.mxu0 %v305
    %309 = vmatpush.msra.mxu0 %v304
    %310 = vmatpush.msra.mxu0 %v303
    %311 = vmatpush.msra.mxu0 %v302
    %312 = vmatpush.msra.mxu0 %v301
    %313 = vmatpush.msra.mxu0 %v300
    %314 = vmatpush.msra.mxu0 %v299
    %315 = vmatpush.msra.mxu0 %v298
    %316 = vmatpush.msra.mxu0 %v297
    %317 = vmatpush.msra.mxu0 %v296
    %318 = vmatpush.msra.mxu0 %v295
    %319 = vmatpush.msra.mxu0 %v294
    %320 = vmatpush.msra.mxu0 %v293
    %321 = vmatpush.msra.mxu0 %v292
    %322 = vmatpush.msra.mxu0 %v291
    %323 = vmatmul.f32.gmra.mxu0 %v288
    %v324 = vpop.f32.mrf.mxu0
    %v325 = vadd.f32 0.0, %v324
    %326 = vdwg.mxu0
    %v327 = vadd.f32 %v290, %v325
    %v328 = vmul.f32 %v288, 0.7
    %v329 = vtanh.pop %v327
    %v330 = vmul.f32 %v329, 0.3
    %v331 = vadd.f32 %v328, %v330
    %332 = vst [vmem:[#allocation3 + $0x5] sm:$0x1] %v331
    %v333 = vld [vmem:[#allocation2 + $0x6] sm:$0x1]
    %v334 = vld [vmem:[%s3] sm:$0xff]
    %v335 = vld [vmem:[%s3 + $0x8] sm:$0xff]
    %v336 = vld [vmem:[%s3 + $0x10] sm:$0xff]
    %v337 = vld [vmem:[%s3 + $0x18] sm:$0xff]
    %v338 = vld [vmem:[%s3 + $0x20] sm:$0xff]
    %v339 = vld [vmem:[%s3 + $0x28] sm:$0xff]
    %v340 = vld [vmem:[%s3 + $0x30] sm:$0xff]
    %v341 = vld [vmem:[%s3 + $0x38] sm:$0xff]
    %v342 = vld [vmem:[%s3 + $0x40] sm:$0xff]
    %v343 = vld [vmem:[%s3 + $0x48] sm:$0xff]
    %v344 = vld [vmem:[%s3 + $0x50] sm:$0xff]
    %v345 = vld [vmem:[%s3 + $0x58] sm:$0xff]
    %v346 = vld [vmem:[%s3 + $0x60] sm:$0xff]
    %v347 = vld [vmem:[%s3 + $0x68] sm:$0xff]
    %v348 = vld [vmem:[%s3 + $0x70] sm:$0xff]
    %v349 = vld [vmem:[%s3 + $0x78] sm:$0xff]
    %350 = vmatpush.msra.mxu0 %v349
    %351 = vmatpush.msra.mxu0 %v348
    %352 = vmatpush.msra.mxu0 %v347
    %353 = vmatpush.msra.mxu0 %v346
    %354 = vmatpush.msra.mxu0 %v345
    %355 = vmatpush.msra.mxu0 %v344
    %356 = vmatpush.msra.mxu0 %v343
    %357 = vmatpush.msra.mxu0 %v342
    %358 = vmatpush.msra.mxu0 %v341
    %359 = vmatpush.msra.mxu0 %v340
    %360 = vmatpush.msra.mxu0 %v339
    %361 = vmatpush.msra.mxu0 %v338
    %362 = vmatpush.msra.mxu0 %v337
    %363 = vmatpush.msra.mxu0 %v336
    %364 = vmatpush.msra.mxu0 %v335
    %365 = vmatpush.msra.mxu0 %v334
    %366 = vmatmul.f32.gmra.mxu0 %v331
    %v367 = vpop.f32.mrf.mxu0
    %v368 = vadd.f32 0.0, %v367
    %369 = vdwg.mxu0
    %v370 = vadd.f32 %v333, %v368
    %v371 = vmul.f32 %v331, 0.7
    %v372 = vtanh.pop %v370
    %v373 = vmul.f32 %v372, 0.3
    %v374 = vadd.f32 %v371, %v373
    %375 = vst [vmem:[#allocation3 + $0x6] sm:$0x1] %v374
    %v376 = vld [vmem:[#allocation2 + $0x7] sm:$0x1]
    %v377 = vld [vmem:[%s3] sm:$0xff]
    %v378 = vld [vmem:[%s3 + $0x8] sm:$0xff]
    %v379 = vld [vmem:[%s3 + $0x10] sm:$0xff]
    %v380 = vld [vmem:[%s3 + $0x18] sm:$0xff]
    %v381 = vld [vmem:[%s3 + $0x20] sm:$0xff]
    %v382 = vld [vmem:[%s3 + $0x28] sm:$0xff]
    %v383 = vld [vmem:[%s3 + $0x30] sm:$0xff]
    %v384 = vld [vmem:[%s3 + $0x38] sm:$0xff]
    %v385 = vld [vmem:[%s3 + $0x40] sm:$0xff]
    %v386 = vld [vmem:[%s3 + $0x48] sm:$0xff]
    %v387 = vld [vmem:[%s3 + $0x50] sm:$0xff]
    %v388 = vld [vmem:[%s3 + $0x58] sm:$0xff]
    %v389 = vld [vmem:[%s3 + $0x60] sm:$0xff]
    %v390 = vld [vmem:[%s3 + $0x68] sm:$0xff]
    %v391 = vld [vmem:[%s3 + $0x70] sm:$0xff]
    %v392 = vld [vmem:[%s3 + $0x78] sm:$0xff]
    %393 = vmatpush.msra.mxu0 %v392
    %394 = vmatpush.msra.mxu0 %v391
    %395 = vmatpush.msra.mxu0 %v390
    %396 = vmatpush.msra.mxu0 %v389
    %397 = vmatpush.msra.mxu0 %v388
    %398 = vmatpush.msra.mxu0 %v387
    %399 = vmatpush.msra.mxu0 %v386
    %400 = vmatpush.msra.mxu0 %v385
    %401 = vmatpush.msra.mxu0 %v384
    %402 = vmatpush.msra.mxu0 %v383
    %403 = vmatpush.msra.mxu0 %v382
    %404 = vmatpush.msra.mxu0 %v381
    %405 = vmatpush.msra.mxu0 %v380
    %406 = vmatpush.msra.mxu0 %v379
    %407 = vmatpush.msra.mxu0 %v378
    %408 = vmatpush.msra.mxu0 %v377
    %409 = vmatmul.f32.gmra.mxu0 %v374
    %v410 = vpop.f32.mrf.mxu0
    %v411 = vadd.f32 0.0, %v410
    %412 = vdwg.mxu0
    %v413 = vadd.f32 %v376, %v411
    %v414 = vmul.f32 %v374, 0.7
    %v415 = vtanh.pop %v413
    %v416 = vmul.f32 %v415, 0.3
    %v417 = vadd.f32 %v414, %v416
    %418 = vst [vmem:[#allocation3 + $0x7] sm:$0x1] %v417
    %419 = vst [vmem:[#allocation8] sm:$0x1] %v417
    %v420 = vld [vmem:[#allocation3] sm:$0xff]
    %v421 = vld [vmem:[%s4] sm:$0xff]
    %v422 = vld [vmem:[%s4 + $0x8] sm:$0xff]
    %v423 = vld [vmem:[%s4 + $0x10] sm:$0xff]
    %v424 = vld [vmem:[%s4 + $0x18] sm:$0xff]
    %v425 = vld [vmem:[%s4 + $0x20] sm:$0xff]
    %v426 = vld [vmem:[%s4 + $0x28] sm:$0xff]
    %v427 = vld [vmem:[%s4 + $0x30] sm:$0xff]
    %v428 = vld [vmem:[%s4 + $0x38] sm:$0xff]
    %v429 = vld [vmem:[%s4 + $0x40] sm:$0xff]
    %v430 = vld [vmem:[%s4 + $0x48] sm:$0xff]
    %v431 = vld [vmem:[%s4 + $0x50] sm:$0xff]
    %v432 = vld [vmem:[%s4 + $0x58] sm:$0xff]
    %v433 = vld [vmem:[%s4 + $0x60] sm:$0xff]
    %v434 = vld [vmem:[%s4 + $0x68] sm:$0xff]
    %v435 = vld [vmem:[%s4 + $0x70] sm:$0xff]
    %v436 = vld [vmem:[%s4 + $0x78] sm:$0xff]
    %437 = vmatpush.msra.mxu0 %v436
    %438 = vmatpush.msra.mxu0 %v435
    %439 = vmatpush.msra.mxu0 %v434
    %440 = vmatpush.msra.mxu0 %v433
    %441 = vmatpush.msra.mxu0 %v432
    %442 = vmatpush.msra.mxu0 %v431
    %443 = vmatpush.msra.mxu0 %v430
    %444 = vmatpush.msra.mxu0 %v429
    %445 = vmatpush.msra.mxu0 %v428
    %446 = vmatpush.msra.mxu0 %v427
    %447 = vmatpush.msra.mxu0 %v426
    %448 = vmatpush.msra.mxu0 %v425
    %449 = vmatpush.msra.mxu0 %v424
    %450 = vmatpush.msra.mxu0 %v423
    %451 = vmatpush.msra.mxu0 %v422
    %452 = vmatpush.msra.mxu0 %v421
    %453 = vmatmul.f32.gmra.mxu0 %v420
    %v454 = vpop.f32.mrf.mxu0
    %v455 = vadd.f32 0.0, %v454
    %456 = vdwg.mxu0
    %vm457 = vcmask 130048
    %458 = vst.msk [vmem:[#allocation7] sm:$0xff] %vm457, %v455
    // Predicated region
    $region26: #{tpu_custom_call.1} parent=1 // pred_check
      _
    $region27: #{tpu_custom_call.1} parent=1 // pred_check_branch
      %460 = sbr.rel (0) target = $region29
    $region28: #{tpu_custom_call.1} parent=1 // pred_region
      %462 = vsyncadd [#allocation6], 0
      %s464 = sshll.u32 [#allocation7], 4
      %s465 = int_to_ptr.vmem [resolvable:$true] %s464
      %s466 = sshll.u32 %s5, 4
      %s467 = int_to_ptr.hbm [resolvable:$true] %s466
      %469 = dma.vmem_to_hbm [thread:$0]  %s465, 128, %s467, [#allocation6]
    $region29: #{tpu_custom_call.1} parent=1 // pred_fallthru
      _
    // Predicated region
    $region30: #{tpu_custom_call.1} parent=1 // pred_check
      _
    $region31: #{tpu_custom_call.1} parent=1 // pred_check_branch
      %471 = sbr.rel (0) target = $region33
    $region32: #{tpu_custom_call.1} parent=1 // pred_region
      %473 = vsyncadd [#allocation9], 0
      %s475 = sshll.u32 [#allocation8], 4
      %s476 = int_to_ptr.vmem [resolvable:$true] %s475
      %s477 = sshll.u32 %s6, 4
      %s478 = int_to_ptr.hbm [resolvable:$true] %s477
      %480 = dma.vmem_to_hbm [thread:$0]  %s476, 16, %s478, [#allocation9]
    $region33: #{tpu_custom_call.1} parent=1 // pred_fallthru
      _
    // Predicated region
    $region34: #{tpu_custom_call.1} parent=1 // pred_check
      _
    $region35: #{tpu_custom_call.1} parent=1 // pred_check_branch
      %482 = sbr.rel (0) target = $region37
    $region36: #{tpu_custom_call.1} parent=1 // pred_region
      %484 = dma.done [#allocation6], 128
    $region37: #{tpu_custom_call.1} parent=1 // pred_fallthru
      _
    // Predicated region
    $region38: #{tpu_custom_call.1} parent=1 // pred_check
      _
    $region39: #{tpu_custom_call.1} parent=1 // pred_check_branch
      %486 = sbr.rel (0) target = $region41
    $region40: #{tpu_custom_call.1} parent=1 // pred_region
      %488 = dma.done [#allocation9], 16
    $region41: #{tpu_custom_call.1} parent=1 // pred_fallthru
      _
    %489 = vsyncpa [#allocation5], 1
    %490 = vsyncpa [#allocation6], 1
    %491 = vsyncpa [#allocation9], 1

</llo_original>
